<compile_context>
chip_gen: v7x
topology: tpu7x:2x2x1
jax: 0.10.0
libtpu: 0.0.40
codegen_flags: <defaults>
</compile_context>

<pallas_src>
import functools
import math

import jax
import jax.numpy as jnp
from jax.experimental import pallas as pl
from jax.experimental.pallas import tpu as pltpu


HEAD_DIM = 20   # fixed by the module: nn.Linear(feature_size, 20)
HEAD_PAD = 32   # zero-padded head width used inside the kernel (aligned slices)


def _attention_kernel(x_kv_ref, x_q_ref, wkv_ref, bkv_ref, wq_ref, bq_ref,
                      *outs_and_scratch, block_b, tq, seq_len, store_attn):
    if store_attn:
        out_ref, attn_ref, k_ref, v_ref = outs_and_scratch
    else:
        out_ref, k_ref, v_ref = outs_and_scratch
        attn_ref = None

    f32 = jnp.float32
    qi = pl.program_id(1)
    feat = x_kv_ref.shape[-1]

    # K/V projection once per batch block; cached in VMEM scratch across the
    # q-tile ("arbitrary") grid axis.
    @pl.when(qi == 0)
    def _project_kv():
        xf = x_kv_ref[...].reshape(block_b * seq_len, feat)
        kv = jnp.dot(xf, wkv_ref[...], preferred_element_type=f32)
        kv = kv + bkv_ref[...].astype(f32)
        kv = kv.reshape(block_b, seq_len, 2 * HEAD_PAD).astype(k_ref.dtype)
        k_ref[...] = kv[..., :HEAD_PAD]
        v_ref[...] = kv[..., HEAD_PAD:]

    # Q projection for this q-tile, flattened over the batch block so the MXU
    # sees M = block_b * tq rows in one matmul.  The 1/sqrt(feature_size)
    # scale is already folded into wq/bq (NOT 1/sqrt(head_dim): matches module).
    xq = x_q_ref[...].reshape(block_b * tq, feat)
    q = jnp.dot(xq, wq_ref[...], preferred_element_type=f32) + bq_ref[...].astype(f32)
    q = q.reshape(block_b, tq, HEAD_PAD)

    k = k_ref[...]
    v = v_ref[...]

    # Q @ K^T contracting the head dim of both operands (no XLU transpose of K).
    scores = jnp.einsum('bqd,bkd->bqk', q.astype(k.dtype), k,
                        preferred_element_type=f32)              # (block_b, tq, S)

    # TODO(synk): optional `mask` argument of the PyTorch forward is not wired
    # in (mask=None path implemented exactly).

    # Numerically stable softmax.  Exact division (not the approximate EUP
    # reciprocal) so the *returned* attention weights match the reference.
    m = jnp.max(scores, axis=-1, keepdims=True)
    e = jnp.exp(scores - m)
    denom = jnp.sum(e, axis=-1, keepdims=True)
    attn = e / denom

    out = jnp.einsum('bqk,bkd->bqd', attn.astype(v.dtype), v,
                     preferred_element_type=f32)                 # (block_b, tq, 32)

    # Emit the output directly at head width 20 (full last dim -> no wrapper
    # slice-copy).  Padded columns of V are exactly zero, so this is exact.
    out_ref[...] = out[..., :HEAD_DIM].astype(out_ref.dtype)
    if store_attn:
        attn_ref[...] = attn.astype(attn_ref.dtype)


def _pack_weights(wk, bk, wq, bq, wv, bv, feature_size, dtype):
    """Zero-pad heads 20->32, fuse K|V, fold 1/sqrt(feature_size) into Q."""
    pad = HEAD_PAD - HEAD_DIM
    scale = 1.0 / math.sqrt(float(feature_size))   # feature_size, NOT head_dim

    def pw(w):
        return jnp.pad(w.astype(jnp.float32), ((0, 0), (0, pad)))

    def pb(b):
        return jnp.pad(b.astype(jnp.float32).reshape(1, HEAD_DIM), ((0, 0), (0, pad)))

    w_kv = jnp.concatenate([pw(wk), pw(wv)], axis=-1).astype(dtype)   # (F, 64)
    b_kv = jnp.concatenate([pb(bk), pb(bv)], axis=-1)                 # (1, 64) f32
    w_q = (pw(wq) * scale).astype(dtype)                              # (F, 32)
    b_q = pb(bq) * scale                                              # (1, 32) f32
    return w_kv, b_kv, w_q, b_q


def _select_tiling(B, S, F, x_bytes, attn_bytes, kv_bytes, store_attn, vmem_cap,
                   block_b=None, tq=None):
    """S-aware, generation-aware block_b / tq / vmem_limit selection."""
    if vmem_cap <= (64 << 20):
        # v7x-class: 64 MiB physical VMEM, 2 TensorCores -> tighter budget and
        # keep at least 2 grid steps along the parallel (batch) axis.
        block_budget, vmem_ceiling, keep_two_steps = 28 << 20, 38 << 20, True
    else:
        # v5e / v6e: 128 MiB physical VMEM, 1 TensorCore -> bigger blocks.
        block_budget, vmem_ceiling, keep_two_steps = 64 << 20, 100 << 20, False

    tq_cands = [c for c in (512, 256, 128, 64, 32, 16, 8) if c < S and S % c == 0]
    tq_user = tq
    if tq is None:
        tq = S if S <= 512 else (tq_cands[0] if tq_cands else S)
    assert S % tq == 0 and (tq == S or tq % 8 == 0), "tq must divide S (mult. of 8)"

    def footprint(bb, tq_):
        # Double-buffered I/O blocks + K/V cache + softmax temporaries + weights.
        io = 2 * (bb * S * F * x_bytes + bb * tq_ * F * x_bytes
                  + bb * tq_ * HEAD_DIM * x_bytes
                  + (bb * tq_ * S * attn_bytes if store_attn else 0))
        scratch = 2 * bb * S * HEAD_PAD * kv_bytes
        inter = 4 * bb * tq_ * S * 4
        wts = 2 * (F * 3 * HEAD_PAD + 3 * HEAD_PAD) * 4
        return io + scratch + inter + wts

    if tq_user is None:
        while footprint(1, tq) > block_budget:
            smaller = [c for c in tq_cands if c < tq]
            if not smaller:
                break
            tq = smaller[0]

    if block_b is None:
        max_bb = B if not (keep_two_steps and B > 1) else max(1, B // 2)
        block_b = 1
        for cand in range(min(max_bb, 256), 0, -1):
            if B % cand == 0 and footprint(cand, tq) <= block_budget:
                block_b = cand
                break
    assert B % block_b == 0, "block_b must divide B"

    vmem_limit = int(max(16 << 20, min(footprint(block_b, tq) + (4 << 20),
                                       vmem_ceiling)))
    return block_b, tq, vmem_limit


def self_attention_pallas(x, wk, bk, wq, bq, wv, bv, *, block_b=None, tq=None,
                          attn_dtype=jnp.float32, return_attn=True):
    """x: (B, S, F); weights w*: (F, 20); biases b*: (1, 20).

    Returns (output (B,S,20), attention_weights (B,S,S)) -- the module's
    forward for mask=None -- or only the output when return_attn=False.
    attn_dtype=jnp.bfloat16 halves the dominant (B,S,S) HBM writeback.
    """
    B, S, F = x.shape
    w_kv, b_kv, w_q, b_q = _pack_weights(wk, bk, wq, bq, wv, bv, F, x.dtype)

    try:
        vmem_cap = int(pltpu.get_tpu_info().vmem_capacity_bytes)
    except Exception:  # pragma: no cover - fall back to v5e/v6e sizing
        vmem_cap = 128 << 20

    x_bytes = jnp.dtype(x.dtype).itemsize
    attn_bytes = jnp.dtype(attn_dtype).itemsize
    block_b, tq, vmem_limit = _select_tiling(
        B, S, F, x_bytes, attn_bytes, x_bytes, return_attn, vmem_cap,
        block_b=block_b, tq=tq)
    grid = (B // block_b, S // tq)

    kernel = functools.partial(_attention_kernel, block_b=block_b, tq=tq,
                               seq_len=S, store_attn=return_attn)

    in_specs = [
        pl.BlockSpec((block_b, S, F), lambda b, qi: (b, 0, 0)),     # x for K/V
        pl.BlockSpec((block_b, tq, F), lambda b, qi: (b, qi, 0)),   # x rows for Q tile
        pl.BlockSpec((F, 2 * HEAD_PAD), lambda b, qi: (0, 0)),      # fused [K|V] weights
        pl.BlockSpec((1, 2 * HEAD_PAD), lambda b, qi: (0, 0)),      # fused [K|V] bias
        pl.BlockSpec((F, HEAD_PAD), lambda b, qi: (0, 0)),          # Q weights (scaled)
        pl.BlockSpec((1, HEAD_PAD), lambda b, qi: (0, 0)),          # Q bias (scaled)
    ]

    out_spec_out = pl.BlockSpec((block_b, tq, HEAD_DIM), lambda b, qi: (b, qi, 0))
    if return_attn:
        out_shape = (jax.ShapeDtypeStruct((B, S, HEAD_DIM), x.dtype),
                     jax.ShapeDtypeStruct((B, S, S), attn_dtype))
        out_specs = [out_spec_out,
                     pl.BlockSpec((block_b, tq, S), lambda b, qi: (b, qi, 0))]
    else:
        out_shape = jax.ShapeDtypeStruct((B, S, HEAD_DIM), x.dtype)
        out_specs = out_spec_out

    flops = int(2 * B * S * F * 3 * HEAD_DIM + 4 * B * S * S * HEAD_DIM)
    bytes_accessed = int(2 * B * S * F * x_bytes
                         + B * S * HEAD_DIM * x_bytes
                         + (B * S * S * attn_bytes if return_attn else 0)
                         + 4 * (F * 3 * HEAD_PAD + 3 * HEAD_PAD))

    return pl.pallas_call(
        kernel,
        out_shape=out_shape,
        grid_spec=pltpu.PrefetchScalarGridSpec(
            num_scalar_prefetch=0,
            grid=grid,
            in_specs=in_specs,
            out_specs=out_specs,
            scratch_shapes=[
                pltpu.VMEM((block_b, S, HEAD_PAD), x.dtype),   # cached K
                pltpu.VMEM((block_b, S, HEAD_PAD), x.dtype),   # cached V
            ]),
        compiler_params=pltpu.CompilerParams(
            # q-tile axis is "arbitrary": the K/V scratch cache carries across it.
            dimension_semantics=("parallel", "arbitrary"),
            vmem_limit_bytes=int(vmem_limit)),
        cost_estimate=pl.CostEstimate(
            flops=flops,
            transcendentals=int(B * S * S),
            bytes_accessed=bytes_accessed),
    )(x, x, w_kv, b_kv, w_q, b_q)


def _reference(x, wk, bk, wq, bq, wv, bv):
    F = x.shape[-1]
    keys = x @ wk + bk
    queries = x @ wq + bq
    values = x @ wv + bv
    scores = jnp.matmul(queries, jnp.swapaxes(keys, -2, -1)) / jnp.sqrt(jnp.float32(F))
    attn = jax.nn.softmax(scores, axis=-1)
    return jnp.matmul(attn, values), attn


if __name__ == "__main__":
    # Small deterministic example: batch=2, seq=8, feature_size=32.
    B, S, F = 2, 8, 32
    key = jax.random.PRNGKey(0)
    kx, kk, kbk, kq, kbq, kv_, kbv = jax.random.split(key, 7)

    x = jax.random.normal(kx, (B, S, F), dtype=jnp.float32)

    # PyTorch nn.Linear default init: U(-1/sqrt(in), 1/sqrt(in)).
    bound = 1.0 / math.sqrt(float(F))
    wk = jax.random.uniform(kk,  (F, HEAD_DIM), jnp.float32, -bound, bound)
    bk = jax.random.uniform(kbk, (1, HEAD_DIM), jnp.float32, -bound, bound)
    wq = jax.random.uniform(kq,  (F, HEAD_DIM), jnp.float32, -bound, bound)
    bq = jax.random.uniform(kbq, (1, HEAD_DIM), jnp.float32, -bound, bound)
    wv = jax.random.uniform(kv_, (F, HEAD_DIM), jnp.float32, -bound, bound)
    bv = jax.random.uniform(kbv, (1, HEAD_DIM), jnp.float32, -bound, bound)

    ref_out, ref_attn = _reference(x, wk, bk, wq, bq, wv, bv)

    # Default path: f32 attention weights, exact parity with the module.
    out, attn = self_attention_pallas(x, wk, bk, wq, bq, wv, bv)
    jax.block_until_ready((out, attn))
    assert jnp.allclose(out, ref_out, atol=2e-3, rtol=2e-3), "output mismatch"
    assert jnp.allclose(attn, ref_attn, atol=2e-3, rtol=2e-3), "attention mismatch"

    # bf16 attention-weights path (halves the dominant (B,S,S) HBM writeback).
    out_b, attn_b = self_attention_pallas(x, wk, bk, wq, bq, wv, bv,
                                          attn_dtype=jnp.bfloat16)
    jax.block_until_ready((out_b, attn_b))
    assert jnp.allclose(out_b, ref_out, atol=2e-3, rtol=2e-3), "bf16 output mismatch"
    assert jnp.allclose(attn_b.astype(jnp.float32), ref_attn,
                        atol=8e-3, rtol=8e-3), "bf16 attention mismatch"

    # Output-only path (skips the attention writeback entirely).
    out_only = self_attention_pallas(x, wk, bk, wq, bq, wv, bv, return_attn=False)
    jax.block_until_ready(out_only)
    assert jnp.allclose(out_only, ref_out, atol=2e-3, rtol=2e-3), "out-only mismatch"

    print("KERNEL_OK")
</pallas_src>

<mosaic_0001>
module attributes {stable_mosaic.version = 11 : i64} {
  func.func @_attention_kernel(%arg0: i32, %arg1: i32, %arg2: memref<2x8x32xf32, #tpu.memory_space<vmem>>, %arg3: memref<2x8x32xf32, #tpu.memory_space<vmem>>, %arg4: memref<32x64xf32, #tpu.memory_space<vmem>>, %arg5: memref<1x64xf32, #tpu.memory_space<vmem>>, %arg6: memref<32x32xf32, #tpu.memory_space<vmem>>, %arg7: memref<1x32xf32, #tpu.memory_space<vmem>>, %arg8: memref<2x8x20xf32, #tpu.memory_space<vmem>>, %arg9: memref<2x8x8xf32, #tpu.memory_space<vmem>>, %arg10: memref<2x8x32xf32, #tpu.memory_space<vmem>>, %arg11: memref<2x8x32xf32, #tpu.memory_space<vmem>>) attributes {dimension_semantics = [#tpu.dimension_semantics<parallel>, #tpu.dimension_semantics<arbitrary>], iteration_bounds = array<i64: 1, 1>, scalar_prefetch = 0 : i64, scratch_operands = 2 : i64, tpu.core_type = #tpu.core_type<tc>, window_params = [{transform_indices = @transform_0, window_bounds = array<i64: 2, 8, 32>}, {transform_indices = @transform_1, window_bounds = array<i64: 2, 8, 32>}, {pipeline_mode = #tpu.pipeline_mode<synchronous>, transform_indices = @transform_2, window_bounds = array<i64: 32, 64>}, {pipeline_mode = #tpu.pipeline_mode<synchronous>, transform_indices = @transform_3, window_bounds = array<i64: 1, 64>}, {pipeline_mode = #tpu.pipeline_mode<synchronous>, transform_indices = @transform_4, window_bounds = array<i64: 32, 32>}, {pipeline_mode = #tpu.pipeline_mode<synchronous>, transform_indices = @transform_5, window_bounds = array<i64: 1, 32>}, {transform_indices = @transform_6, window_bounds = array<i64: 2, 8, 20>}, {transform_indices = @transform_7, window_bounds = array<i64: 2, 8, 8>}]} {
    %c0_i32 = arith.constant 0 : i32
    %0 = arith.cmpi eq, %arg1, %c0_i32 : i32
    %1 = arith.extui %0 : i1 to i32
    %c0_i32_0 = arith.constant 0 : i32
    %2 = arith.cmpi ne, %1, %c0_i32_0 : i32
    scf.if %2 {
      %c0_23 = arith.constant 0 : index
      %c0_24 = arith.constant 0 : index
      %c0_25 = arith.constant 0 : index
      %27 = vector.load %arg2[%c0_23, %c0_24, %c0_25] : memref<2x8x32xf32, #tpu.memory_space<vmem>>, vector<2x8x32xf32>
      %28 = vector.shape_cast %27 : vector<2x8x32xf32> to vector<16x32xf32>
      %c0_26 = arith.constant 0 : index
      %c0_27 = arith.constant 0 : index
      %29 = vector.load %arg4[%c0_26, %c0_27] : memref<32x64xf32, #tpu.memory_space<vmem>>, vector<32x64xf32>
      %cst_28 = arith.constant dense<0.000000e+00> : vector<16x64xf32>
      %30 = tpu.matmul %28, %29, %cst_28 {dimension_numbers = #tpu.dot_dimension_numbers<[1], [0], [0], [1], [0, 0, 1, 1], [], []>} : vector<16x32xf32>, vector<32x64xf32>, vector<16x64xf32> -> vector<16x64xf32>
      %c0_29 = arith.constant 0 : index
      %c0_30 = arith.constant 0 : index
      %31 = vector.load %arg5[%c0_29, %c0_30] : memref<1x64xf32, #tpu.memory_space<vmem>>, vector<1x64xf32>
      %32 = vector.broadcast %31 : vector<1x64xf32> to vector<16x64xf32>
      %33 = arith.addf %30, %32 : vector<16x64xf32>
      %34 = vector.shape_cast %33 : vector<16x64xf32> to vector<2x8x64xf32>
      %35 = vector.extract_strided_slice %34 {offsets = [0, 0, 0], sizes = [2, 8, 32], strides = [1, 1, 1]} : vector<2x8x64xf32> to vector<2x8x32xf32>
      %c0_31 = arith.constant 0 : index
      %c0_32 = arith.constant 0 : index
      %c0_33 = arith.constant 0 : index
      %36 = vector.load %arg10[%c0_31, %c0_32, %c0_33] : memref<2x8x32xf32, #tpu.memory_space<vmem>>, vector<2x8x32xf32>
      tpu.vector_store %arg10[%c0_31, %c0_32, %c0_33], %35 {strides = array<i32>} : memref<2x8x32xf32, #tpu.memory_space<vmem>>, vector<2x8x32xf32>,
      %37 = vector.extract_strided_slice %34 {offsets = [0, 0, 32], sizes = [2, 8, 32], strides = [1, 1, 1]} : vector<2x8x64xf32> to vector<2x8x32xf32>
      %c0_34 = arith.constant 0 : index
      %c0_35 = arith.constant 0 : index
      %c0_36 = arith.constant 0 : index
      %38 = vector.load %arg11[%c0_34, %c0_35, %c0_36] : memref<2x8x32xf32, #tpu.memory_space<vmem>>, vector<2x8x32xf32>
      tpu.vector_store %arg11[%c0_34, %c0_35, %c0_36], %37 {strides = array<i32>} : memref<2x8x32xf32, #tpu.memory_space<vmem>>, vector<2x8x32xf32>,
    } else {
    }
    %c0 = arith.constant 0 : index
    %c0_1 = arith.constant 0 : index
    %c0_2 = arith.constant 0 : index
    %3 = vector.load %arg3[%c0, %c0_1, %c0_2] : memref<2x8x32xf32, #tpu.memory_space<vmem>>, vector<2x8x32xf32>
    %4 = vector.shape_cast %3 : vector<2x8x32xf32> to vector<16x32xf32>
    %c0_3 = arith.constant 0 : index
    %c0_4 = arith.constant 0 : index
    %5 = vector.load %arg6[%c0_3, %c0_4] : memref<32x32xf32, #tpu.memory_space<vmem>>, vector<32x32xf32>
    %cst = arith.constant dense<0.000000e+00> : vector<16x32xf32>
    %6 = tpu.matmul %4, %5, %cst {dimension_numbers = #tpu.dot_dimension_numbers<[1], [0], [0], [1], [0, 0, 1, 1], [], []>} : vector<16x32xf32>, vector<32x32xf32>, vector<16x32xf32> -> vector<16x32xf32>
    %c0_5 = arith.constant 0 : index
    %c0_6 = arith.constant 0 : index
    %7 = vector.load %arg7[%c0_5, %c0_6] : memref<1x32xf32, #tpu.memory_space<vmem>>, vector<1x32xf32>
    %8 = vector.broadcast %7 : vector<1x32xf32> to vector<16x32xf32>
    %9 = arith.addf %6, %8 : vector<16x32xf32>
    %10 = vector.shape_cast %9 : vector<16x32xf32> to vector<2x8x32xf32>
    %c0_7 = arith.constant 0 : index
    %c0_8 = arith.constant 0 : index
    %c0_9 = arith.constant 0 : index
    %11 = vector.load %arg10[%c0_7, %c0_8, %c0_9] : memref<2x8x32xf32, #tpu.memory_space<vmem>>, vector<2x8x32xf32>
    %c0_10 = arith.constant 0 : index
    %c0_11 = arith.constant 0 : index
    %c0_12 = arith.constant 0 : index
    %12 = vector.load %arg11[%c0_10, %c0_11, %c0_12] : memref<2x8x32xf32, #tpu.memory_space<vmem>>, vector<2x8x32xf32>
    "tpu.trace_start"() <{level = 10 : i32, message = "bqd,bkd->bqk"}> : () -> ()
    %cst_13 = arith.constant dense<0.000000e+00> : vector<2x8x8xf32>
    %13 = tpu.matmul %10, %11, %cst_13 {dimension_numbers = #tpu.dot_dimension_numbers<[2], [2], [1], [1], [0, 0, 0, 1, 1, 1], [0], [0]>} : vector<2x8x32xf32>, vector<2x8x32xf32>, vector<2x8x8xf32> -> vector<2x8x8xf32>
    "tpu.trace_stop"() : () -> ()
    %cst_14 = arith.constant dense<0xFF800000> : vector<2x8xf32>
    %14 = vector.multi_reduction <maximumf>, %13, %cst_14 [2] : vector<2x8x8xf32> to vector<2x8xf32>
    %15 = vector.shape_cast %14 : vector<2x8xf32> to vector<2x8x1xf32>
    %16 = vector.broadcast %15 : vector<2x8x1xf32> to vector<2x8x8xf32>
    %17 = arith.subf %13, %16 : vector<2x8x8xf32>
    %18 = math.exp %17 : vector<2x8x8xf32>
    %cst_15 = arith.constant dense<0.000000e+00> : vector<2x8xf32>
    %19 = vector.multi_reduction <add>, %18, %cst_15 [2] : vector<2x8x8xf32> to vector<2x8xf32>
    %20 = vector.shape_cast %19 : vector<2x8xf32> to vector<2x8x1xf32>
    %21 = vector.broadcast %20 : vector<2x8x1xf32> to vector<2x8x8xf32>
    %22 = arith.divf %18, %21 : vector<2x8x8xf32>
    "tpu.trace_start"() <{level = 10 : i32, message = "bqk,bkd->bqd"}> : () -> ()
    %cst_16 = arith.constant dense<0.000000e+00> : vector<2x8x32xf32>
    %23 = tpu.matmul %22, %12, %cst_16 {dimension_numbers = #tpu.dot_dimension_numbers<[2], [1], [1], [2], [0, 0, 0, 1, 1, 2], [0], [0]>} : vector<2x8x8xf32>, vector<2x8x32xf32>, vector<2x8x32xf32> -> vector<2x8x32xf32>
    "tpu.trace_stop"() : () -> ()
    %24 = vector.extract_strided_slice %23 {offsets = [0, 0, 0], sizes = [2, 8, 20], strides = [1, 1, 1]} : vector<2x8x32xf32> to vector<2x8x20xf32>
    %c0_17 = arith.constant 0 : index
    %c0_18 = arith.constant 0 : index
    %c0_19 = arith.constant 0 : index
    %25 = vector.load %arg8[%c0_17, %c0_18, %c0_19] : memref<2x8x20xf32, #tpu.memory_space<vmem>>, vector<2x8x20xf32>
    tpu.vector_store %arg8[%c0_17, %c0_18, %c0_19], %24 {strides = array<i32>} : memref<2x8x20xf32, #tpu.memory_space<vmem>>, vector<2x8x20xf32>,
    %c0_20 = arith.constant 0 : index
    %c0_21 = arith.constant 0 : index
    %c0_22 = arith.constant 0 : index
    %26 = vector.load %arg9[%c0_20, %c0_21, %c0_22] : memref<2x8x8xf32, #tpu.memory_space<vmem>>, vector<2x8x8xf32>
    tpu.vector_store %arg9[%c0_20, %c0_21, %c0_22], %22 {strides = array<i32>} : memref<2x8x8xf32, #tpu.memory_space<vmem>>, vector<2x8x8xf32>,
    return
  }
  func.func @transform_0(%arg0: i32, %arg1: i32) -> (i32, i32, i32) {
    %c0_i32 = arith.constant 0 : i32
    %c0_i32_0 = arith.constant 0 : i32
    %c0_i32_1 = arith.constant 0 : i32
    return %arg0, %c0_i32, %c0_i32_0 : i32, i32, i32
  }
  func.func @transform_1(%arg0: i32, %arg1: i32) -> (i32, i32, i32) {
    %c0_i32 = arith.constant 0 : i32
    %c0_i32_0 = arith.constant 0 : i32
    return %arg0, %arg1, %c0_i32 : i32, i32, i32
  }
  func.func @transform_2(%arg0: i32, %arg1: i32) -> (i32, i32) {
    %c0_i32 = arith.constant 0 : i32
    %c0_i32_0 = arith.constant 0 : i32
    %c0_i32_1 = arith.constant 0 : i32
    return %c0_i32, %c0_i32_0 : i32, i32
  }
  func.func @transform_3(%arg0: i32, %arg1: i32) -> (i32, i32) {
    %c0_i32 = arith.constant 0 : i32
    %c0_i32_0 = arith.constant 0 : i32
    %c0_i32_1 = arith.constant 0 : i32
    return %c0_i32, %c0_i32_0 : i32, i32
  }
  func.func @transform_4(%arg0: i32, %arg1: i32) -> (i32, i32) {
    %c0_i32 = arith.constant 0 : i32
    %c0_i32_0 = arith.constant 0 : i32
    %c0_i32_1 = arith.constant 0 : i32
    return %c0_i32, %c0_i32_0 : i32, i32
  }
  func.func @transform_5(%arg0: i32, %arg1: i32) -> (i32, i32) {
    %c0_i32 = arith.constant 0 : i32
    %c0_i32_0 = arith.constant 0 : i32
    %c0_i32_1 = arith.constant 0 : i32
    return %c0_i32, %c0_i32_0 : i32, i32
  }
  func.func @transform_6(%arg0: i32, %arg1: i32) -> (i32, i32, i32) {
    %c0_i32 = arith.constant 0 : i32
    %c0_i32_0 = arith.constant 0 : i32
    return %arg0, %arg1, %c0_i32 : i32, i32, i32
  }
  func.func @transform_7(%arg0: i32, %arg1: i32) -> (i32, i32, i32) {
    %c0_i32 = arith.constant 0 : i32
    %c0_i32_0 = arith.constant 0 : i32
    return %arg0, %arg1, %c0_i32 : i32, i32, i32
  }
}

</mosaic_0001>

<llo_original>
// kernel: tpu_custom_call.1
$region0: #{tpu_custom_call.1}
  #allocation0 [shape = 'u32[]', space=smem, size = 0x4, offset = 0x4, fixed_abs, tag = 'smem constant byte address 0x4 - core index']
  #allocation1 [shape = 'u32[144,128]{1,0:T(1,128)}', space=vmem, size = 0x12000, scoped, tag = 'internal scratch']
  #allocation2 [shape = 'f32[2,8,32]{2,1,0:T(8,128)}', space=vmem, size = 0x2000, scoped, tag = 'scratch operand']
  #allocation3 [shape = 'f32[2,8,32]{2,1,0:T(8,128)}', space=vmem, size = 0x2000, scoped, tag = 'scratch operand']
  %s0 = inlined_call_operand.hbm [shape: f32[2,8,32], index: 0, kind: input, shape index: {}]
  %s1 = inlined_call_operand.hbm [shape: f32[2,8,32], index: 1, kind: input, shape index: {}]
  %s2 = inlined_call_operand.hbm [shape: f32[32,64], index: 2, kind: input, shape index: {}]
  %s3 = inlined_call_operand.vmem [shape: f32[1,64], index: 3, kind: input, shape index: {}]
  %s4 = inlined_call_operand.hbm [shape: f32[32,32], index: 4, kind: input, shape index: {}]
  %s5 = inlined_call_operand.vmem [shape: f32[1,32], index: 5, kind: input, shape index: {}]
  %s6 = inlined_call_operand.hbm [shape: f32[2,8,20], index: 6, kind: output, shape index: {0}]
  %s7 = inlined_call_operand.hbm [shape: f32[2,8,8], index: 7, kind: output, shape index: {1}]
  %8 = xla_tuple %s6, %s7
  %s9 = sld [smem:[#allocation0]]
  $region62: #{tpu_custom_call.1} parent=0
    _
  %s11 = ssub.s32 1, %s9
  %s12 = scalar_select 0, %s11, %s9
  $region1: #{tpu_custom_call.1} parent=0
    #allocation4 [shape = 'u8[8192]{0}', space=vmem, size = 0x2000, scoped, tag = 'input window, operand 0, single buffered']
    #allocation5 [shape = 's32[1]{0}', space=sflag, size = 0x4, scoped, tag = 'scoped memory for tpu_custom_call.1']
    #allocation6 [shape = 's32[1]{0}', space=sflag, size = 0x4, scoped, tag = 'scoped memory for tpu_custom_call.1']
    #allocation7 [shape = 'u8[8192]{0}', space=vmem, size = 0x2000, scoped, tag = 'input window, operand 1, single buffered']
    #allocation8 [shape = 's32[1]{0}', space=sflag, size = 0x4, scoped, tag = 'scoped memory for tpu_custom_call.1']
    #allocation9 [shape = 'u8[16384]{0}', space=vmem, size = 0x4000, scoped, tag = 'input window, operand 2, single buffered']
    #allocation10 [shape = 'u8[16384]{0}', space=vmem, size = 0x4000, scoped, tag = 'input window, operand 4, single buffered']
    #allocation11 [shape = 's32[1]{0}', space=sflag, size = 0x4, scoped, tag = 'scoped memory for tpu_custom_call.1']
    #allocation12 [shape = 'u8[8192]{0}', space=vmem, size = 0x2000, scoped, tag = 'output window, operand 0, single buffered']
    #allocation13 [shape = 'u8[8192]{0}', space=vmem, size = 0x2000, scoped, tag = 'output window, operand 1, single buffered']
    #allocation14 [shape = 's32[1]{0}', space=sflag, size = 0x4, scoped, tag = 'scoped memory for tpu_custom_call.1']
    %13 = vsyncpa [#allocation5], 0
    %14 = vsyncpa [#allocation8], 0
    %15 = vsyncpa [#allocation11], 0
    %16 = vsyncpa [#allocation6], 0
    %17 = vsyncpa [#allocation14], 0
    // Predicated region
    $region2: #{tpu_custom_call.1} parent=1 // pred_check
      _
    $region3: #{tpu_custom_call.1} parent=1 // pred_check_branch
      %19 = sbr.rel (0) target = $region5
    $region4: #{tpu_custom_call.1} parent=1 // pred_region
      %s21 = ssub.s32 256, 256
      %22 = vsyncadd [#allocation5], %s21
      %s23 = sshll.u32 [#allocation4], 4
      %s24 = int_to_ptr.vmem [resolvable:$true] %s23
      %29 = dma.hbm_to_vmem [thread:$0]  %s0, 256, %s24, [#allocation5], 128, 128, 8
    $region5: #{tpu_custom_call.1} parent=1 // pred_fallthru
      _
    // Predicated region
    $region6: #{tpu_custom_call.1} parent=1 // pred_check
      _
    $region7: #{tpu_custom_call.1} parent=1 // pred_check_branch
      %31 = sbr.rel (0) target = $region9
    $region8: #{tpu_custom_call.1} parent=1 // pred_region
      %s33 = ssub.s32 256, 256
      %34 = vsyncadd [#allocation8], %s33
      %s35 = sshll.u32 [#allocation7], 4
      %s36 = int_to_ptr.vmem [resolvable:$true] %s35
      %41 = dma.hbm_to_vmem [thread:$0]  %s1, 256, %s36, [#allocation8], 128, 128, 8
    $region9: #{tpu_custom_call.1} parent=1 // pred_fallthru
      _
    // Predicated region
    $region10: #{tpu_custom_call.1} parent=1 // pred_check
      _
    $region11: #{tpu_custom_call.1} parent=1 // pred_check_branch
      %43 = sbr.rel (0) target = $region13
    $region12: #{tpu_custom_call.1} parent=1 // pred_region
      %s45 = ssub.s32 512, 512
      %46 = vsyncadd [#allocation8], %s45
      %s47 = sshll.u32 [#allocation9], 4
      %s48 = int_to_ptr.vmem [resolvable:$true] %s47
      %53 = dma.hbm_to_vmem [thread:$0]  %s2, 512, %s48, [#allocation8], 128, 128, 8
    $region13: #{tpu_custom_call.1} parent=1 // pred_fallthru
      _
    // Predicated region
    $region14: #{tpu_custom_call.1} parent=1 // pred_check
      _
    $region15: #{tpu_custom_call.1} parent=1 // pred_check_branch
      %55 = sbr.rel (0) target = $region17
    $region16: #{tpu_custom_call.1} parent=1 // pred_region
      _
    $region17: #{tpu_custom_call.1} parent=1 // pred_fallthru
      _
    // Predicated region
    $region18: #{tpu_custom_call.1} parent=1 // pred_check
      _
    $region19: #{tpu_custom_call.1} parent=1 // pred_check_branch
      %57 = sbr.rel (0) target = $region21
    $region20: #{tpu_custom_call.1} parent=1 // pred_region
      %s59 = ssub.s32 512, 512
      %60 = vsyncadd [#allocation11], %s59
      %s61 = sshll.u32 [#allocation10], 4
      %s62 = int_to_ptr.vmem [resolvable:$true] %s61
      %67 = dma.hbm_to_vmem [thread:$0]  %s4, 512, %s62, [#allocation11], 128, 128, 8
    $region21: #{tpu_custom_call.1} parent=1 // pred_fallthru
      _
    // Predicated region
    $region22: #{tpu_custom_call.1} parent=1 // pred_check
      _
    $region23: #{tpu_custom_call.1} parent=1 // pred_check_branch
      %69 = sbr.rel (0) target = $region25
    $region24: #{tpu_custom_call.1} parent=1 // pred_region
      _
    $region25: #{tpu_custom_call.1} parent=1 // pred_fallthru
      _
    // Predicated region
    $region26: #{tpu_custom_call.1} parent=1 // pred_check
      _
    $region27: #{tpu_custom_call.1} parent=1 // pred_check_branch
      %71 = sbr.rel (0) target = $region29
    $region28: #{tpu_custom_call.1} parent=1 // pred_region
      %72 = dma.done [#allocation5], 256
    $region29: #{tpu_custom_call.1} parent=1 // pred_fallthru
      _
    // Predicated region
    $region30: #{tpu_custom_call.1} parent=1 // pred_check
      _
    $region31: #{tpu_custom_call.1} parent=1 // pred_check_branch
      %74 = sbr.rel (0) target = $region33
    $region32: #{tpu_custom_call.1} parent=1 // pred_region
      %75 = dma.done [#allocation8], 256
    $region33: #{tpu_custom_call.1} parent=1 // pred_fallthru
      _
    // Predicated region
    $region34: #{tpu_custom_call.1} parent=1 // pred_check
      _
    $region35: #{tpu_custom_call.1} parent=1 // pred_check_branch
      %77 = sbr.rel (0) target = $region37
    $region36: #{tpu_custom_call.1} parent=1 // pred_region
      %78 = dma.done [#allocation8], 512
    $region37: #{tpu_custom_call.1} parent=1 // pred_fallthru
      _
    // Predicated region
    $region38: #{tpu_custom_call.1} parent=1 // pred_check
      _
    $region39: #{tpu_custom_call.1} parent=1 // pred_check_branch
      %80 = sbr.rel (0) target = $region41
    $region40: #{tpu_custom_call.1} parent=1 // pred_region
      %81 = dma.done [#allocation11], 512
    $region41: #{tpu_custom_call.1} parent=1 // pred_fallthru
      _
    %p82 = scmp.eq.s32.totalorder 0, 0
    // Predicated region
    $region42: #{tpu_custom_call.1} parent=1 // pred_check
      %p83 = pneg %p82
    $region43: #{tpu_custom_call.1} parent=1 // pred_check_branch
      %85 = sbr.rel (%p83) target = $region45
    $region44: #{tpu_custom_call.1} parent=1 // pred_region
      %v86 = vld [vmem:[#allocation4] sm:$0xff]
      %v87 = vld [vmem:[#allocation4 + $0x8] sm:$0xff]
      %v88 = vld [vmem:[#allocation9] sm:$0xff]
      %v89 = vld [vmem:[#allocation9 + $0x8] sm:$0xff]
      %v90 = vld [vmem:[#allocation9 + $0x10] sm:$0xff]
      %v91 = vld [vmem:[#allocation9 + $0x18] sm:$0xff]
      %v92 = vld [vmem:[%s3] sm:$0x1]
      %v94 = vlaneseq
      %v95 = vshrl.u32 %v94, 7
      %v96 = vsub.s32 0, %v95
      %v97 = vrot.slane %v92, %v96
      %vm99 = vcmask 261120
      %v101 = vsel %vm99, %v86, 0
      %v104 = vsel %vm99, %v87, 0
      %106 = vmatprep.subr.mxu0 0.0
      %107 = vmatpush1.msra.mxu0 %v88
      %108 = vmatprep.subr.mxu0 0.0
      %109 = vmatpush1.msra.mxu0 %v89
      %110 = vmatprep.subr.mxu0 0.0
      %111 = vmatpush1.msra.mxu0 %v90
      %112 = vmatprep.subr.mxu0 0.0
      %113 = vmatpush1.msra.mxu0 %v91
      %114 = vmatprep.subr.mxu0 0.0
      %115 = vmatpush1.msra.mxu0 0.0
      %116 = vmatprep.subr.mxu0 0.0
      %117 = vmatpush1.msra.mxu0 0.0
      %118 = vmatprep.subr.mxu0 0.0
      %119 = vmatpush1.msra.mxu0 0.0
      %120 = vmatprep.subr.mxu0 0.0
      %121 = vmatpush1.msra.mxu0 0.0
      %122 = vmatprep.subr.mxu0 0.0
      %123 = vmatpush1.msra.mxu0 0.0
      %124 = vmatprep.subr.mxu0 0.0
      %125 = vmatpush1.msra.mxu0 0.0
      %126 = vmatprep.subr.mxu0 0.0
      %127 = vmatpush1.msra.mxu0 0.0
      %128 = vmatprep.subr.mxu0 0.0
      %129 = vmatpush1.msra.mxu0 0.0
      %130 = vmatprep.subr.mxu0 0.0
      %131 = vmatpush1.msra.mxu0 0.0
      %132 = vmatprep.subr.mxu0 0.0
      %133 = vmatpush1.msra.mxu0 0.0
      %134 = vmatprep.subr.mxu0 0.0
      %135 = vmatpush1.msra.mxu0 0.0
      %136 = vmatprep.subr.mxu0 0.0
      %137 = vmatpush1.msra.mxu0 0.0
      %138 = vmatprep.subr.mxu0 0.0
      %139 = vmatpush1.msra.mxu0 0.0
      %140 = vmatprep.subr.mxu0 0.0
      %141 = vmatpush1.msra.mxu0 0.0
      %142 = vmatprep.subr.mxu0 0.0
      %143 = vmatpush1.msra.mxu0 0.0
      %144 = vmatprep.subr.mxu0 0.0
      %145 = vmatpush1.msra.mxu0 0.0
      %146 = vmatprep.subr.mxu0 0.0
      %147 = vmatpush1.msra.mxu0 0.0
      %148 = vmatprep.subr.mxu0 0.0
      %149 = vmatpush1.msra.mxu0 0.0
      %150 = vmatprep.subr.mxu0 0.0
      %151 = vmatpush1.msra.mxu0 0.0
      %152 = vmatprep.subr.mxu0 0.0
      %153 = vmatpush1.msra.mxu0 0.0
      %154 = vmatprep.subr.mxu0 0.0
      %155 = vmatpush1.msra.mxu0 0.0
      %156 = vmatprep.subr.mxu0 0.0
      %157 = vmatpush1.msra.mxu0 0.0
      %158 = vmatprep.subr.mxu0 0.0
      %159 = vmatpush1.msra.mxu0 0.0
      %160 = vmatprep.subr.mxu0 0.0
      %161 = vmatpush1.msra.mxu0 0.0
      %162 = vmatprep.subr.mxu0 0.0
      %163 = vmatpush1.msra.mxu0 0.0
      %164 = vmatprep.subr.mxu0 0.0
      %165 = vmatpush1.msra.mxu0 0.0
      %166 = vmatprep.subr.mxu0 0.0
      %167 = vmatpush1.msra.mxu0 0.0
      %168 = vmatprep.subr.mxu0 0.0
      %169 = vmatpush1.msra.mxu0 0.0
      %170 = vmatprep.mubr.f32.mxu0 0.0
      %171 = vmatmul.mubr.f32.gmra.mrb[0].mxu0 %v101
      %v172 = vpop.f32.mrb[0].mxu0
      %v173 = vadd.f32 %v97, %v172
      %v174 = vpop.f32.mrb[0].mxu0
      %175 = vmatprep.mubr.f32.mxu0 0.0
      %176 = vmatmul.mubr.f32.gmra.mrb[0].mxu0 %v104
      %v177 = vpop.f32.mrb[0].mxu0
      %v178 = vadd.f32 %v97, %v177
      %v179 = vpop.f32.mrb[0].mxu0
      %180 = vdwg.mxu0
      %181 = vst.msk [vmem:[#allocation2] sm:$0xff] %vm99, %v173
      %182 = vst.msk [vmem:[#allocation2 + $0x8] sm:$0xff] %vm99, %v178
      %185 = vrot.lane.b32.xlu0 %v173, 96
      %v186 = vpop.permute.xlu0 %185
      %187 = vrot.lane.b32.xlu0 %v178, 96
      %v188 = vpop.permute.xlu0 %187
      %191 = vst.msk [vmem:[#allocation3] sm:$0xff] %vm99, %v186
      %192 = vst.msk [vmem:[#allocation3 + $0x8] sm:$0xff] %vm99, %v188
    $region45: #{tpu_custom_call.1} parent=1 // pred_fallthru
      _
    %v193 = vld [vmem:[#allocation7] sm:$0xff]
    %v194 = vld [vmem:[#allocation7 + $0x8] sm:$0xff]
    %v195 = vld [vmem:[#allocation10] sm:$0xff]
    %v196 = vld [vmem:[#allocation10 + $0x8] sm:$0xff]
    %v197 = vld [vmem:[#allocation10 + $0x10] sm:$0xff]
    %v198 = vld [vmem:[#allocation10 + $0x18] sm:$0xff]
    %v199 = vld [vmem:[%s5] sm:$0x1]
    %v201 = vlaneseq
    %v202 = vshrl.u32 %v201, 7
    %v203 = vsub.s32 0, %v202
    %v204 = vrot.slane %v199, %v203
    %vm206 = vcmask 261120
    %v208 = vsel %vm206, %v193, 0
    %v211 = vsel %vm206, %v194, 0
    %213 = vmatprep.subr.mxu0 0.0
    %214 = vmatpush1.msra.mxu0 %v195
    %215 = vmatprep.subr.mxu0 0.0
    %216 = vmatpush1.msra.mxu0 %v196
    %217 = vmatprep.subr.mxu0 0.0
    %218 = vmatpush1.msra.mxu0 %v197
    %219 = vmatprep.subr.mxu0 0.0
    %220 = vmatpush1.msra.mxu0 %v198
    %221 = vmatprep.subr.mxu0 0.0
    %222 = vmatpush1.msra.mxu0 0.0
    %223 = vmatprep.subr.mxu0 0.0
    %224 = vmatpush1.msra.mxu0 0.0
    %225 = vmatprep.subr.mxu0 0.0
    %226 = vmatpush1.msra.mxu0 0.0
    %227 = vmatprep.subr.mxu0 0.0
    %228 = vmatpush1.msra.mxu0 0.0
    %229 = vmatprep.subr.mxu0 0.0
    %230 = vmatpush1.msra.mxu0 0.0
    %231 = vmatprep.subr.mxu0 0.0
    %232 = vmatpush1.msra.mxu0 0.0
    %233 = vmatprep.subr.mxu0 0.0
    %234 = vmatpush1.msra.mxu0 0.0
    %235 = vmatprep.subr.mxu0 0.0
    %236 = vmatpush1.msra.mxu0 0.0
    %237 = vmatprep.subr.mxu0 0.0
    %238 = vmatpush1.msra.mxu0 0.0
    %239 = vmatprep.subr.mxu0 0.0
    %240 = vmatpush1.msra.mxu0 0.0
    %241 = vmatprep.subr.mxu0 0.0
    %242 = vmatpush1.msra.mxu0 0.0
    %243 = vmatprep.subr.mxu0 0.0
    %244 = vmatpush1.msra.mxu0 0.0
    %245 = vmatprep.subr.mxu0 0.0
    %246 = vmatpush1.msra.mxu0 0.0
    %247 = vmatprep.subr.mxu0 0.0
    %248 = vmatpush1.msra.mxu0 0.0
    %249 = vmatprep.subr.mxu0 0.0
    %250 = vmatpush1.msra.mxu0 0.0
    %251 = vmatprep.subr.mxu0 0.0
    %252 = vmatpush1.msra.mxu0 0.0
    %253 = vmatprep.subr.mxu0 0.0
    %254 = vmatpush1.msra.mxu0 0.0
    %255 = vmatprep.subr.mxu0 0.0
    %256 = vmatpush1.msra.mxu0 0.0
    %257 = vmatprep.subr.mxu0 0.0
    %258 = vmatpush1.msra.mxu0 0.0
    %259 = vmatprep.subr.mxu0 0.0
    %260 = vmatpush1.msra.mxu0 0.0
    %261 = vmatprep.subr.mxu0 0.0
    %262 = vmatpush1.msra.mxu0 0.0
    %263 = vmatprep.subr.mxu0 0.0
    %264 = vmatpush1.msra.mxu0 0.0
    %265 = vmatprep.subr.mxu0 0.0
    %266 = vmatpush1.msra.mxu0 0.0
    %267 = vmatprep.subr.mxu0 0.0
    %268 = vmatpush1.msra.mxu0 0.0
    %269 = vmatprep.subr.mxu0 0.0
    %270 = vmatpush1.msra.mxu0 0.0
    %271 = vmatprep.subr.mxu0 0.0
    %272 = vmatpush1.msra.mxu0 0.0
    %273 = vmatprep.subr.mxu0 0.0
    %274 = vmatpush1.msra.mxu0 0.0
    %275 = vmatprep.subr.mxu0 0.0
    %276 = vmatpush1.msra.mxu0 0.0
    %277 = vmatprep.mubr.f32.mxu0 0.0
    %278 = vmatmul.mubr.f32.gmra.mrb[0].mxu0 %v208
    %v279 = vpop.f32.mrb[0].mxu0
    %v280 = vadd.f32 %v204, %v279
    %v281 = vpop.f32.mrb[0].mxu0
    %282 = vmatprep.mubr.f32.mxu0 0.0
    %283 = vmatmul.mubr.f32.gmra.mrb[0].mxu0 %v211
    %v284 = vpop.f32.mrb[0].mxu0
    %v285 = vadd.f32 %v204, %v284
    %v286 = vpop.f32.mrb[0].mxu0
    %287 = vdwg.mxu0
    %v288 = vld [vmem:[#allocation2] sm:$0xff]
    %v289 = vld [vmem:[#allocation2 + $0x8] sm:$0xff]
    %v290 = vld [vmem:[#allocation3] sm:$0xff]
    %v291 = vld [vmem:[#allocation3 + $0x8] sm:$0xff]
    %v293 = vsel %vm206, %v280, 0
    %v296 = vsel %vm206, %v288, 0
    %298 = vmatprep.subr.mxu0 0.0
    %299 = vmatpush1.xpose.msra.mxu0 %v296
    %300 = vmatprep.subr.mxu0 0.0
    %301 = vmatpush1.xpose.msra.mxu0 0.0
    %302 = vmatprep.subr.mxu0 0.0
    %303 = vmatpush1.xpose.msra.mxu0 0.0
    %304 = vmatprep.subr.mxu0 0.0
    %305 = vmatpush1.xpose.msra.mxu0 0.0
    %306 = vmatprep.subr.mxu0 0.0
    %307 = vmatpush1.xpose.msra.mxu0 0.0
    %308 = vmatprep.subr.mxu0 0.0
    %309 = vmatpush1.xpose.msra.mxu0 0.0
    %310 = vmatprep.subr.mxu0 0.0
    %311 = vmatpush1.xpose.msra.mxu0 0.0
    %312 = vmatprep.subr.mxu0 0.0
    %313 = vmatpush1.xpose.msra.mxu0 0.0
    %314 = vmatprep.subr.mxu0 0.0
    %315 = vmatpush1.xpose.msra.mxu0 0.0
    %316 = vmatprep.subr.mxu0 0.0
    %317 = vmatpush1.xpose.msra.mxu0 0.0
    %318 = vmatprep.subr.mxu0 0.0
    %319 = vmatpush1.xpose.msra.mxu0 0.0
    %320 = vmatprep.subr.mxu0 0.0
    %321 = vmatpush1.xpose.msra.mxu0 0.0
    %322 = vmatprep.subr.mxu0 0.0
    %323 = vmatpush1.xpose.msra.mxu0 0.0
    %324 = vmatprep.subr.mxu0 0.0
    %325 = vmatpush1.xpose.msra.mxu0 0.0
    %326 = vmatprep.subr.mxu0 0.0
    %327 = vmatpush1.xpose.msra.mxu0 0.0
    %328 = vmatprep.subr.mxu0 0.0
    %329 = vmatpush1.xpose.msra.mxu0 0.0
    %330 = vmatprep.subr.mxu0 0.0
    %331 = vmatpush1.xpose.msra.mxu0 0.0
    %332 = vmatprep.subr.mxu0 0.0
    %333 = vmatpush1.xpose.msra.mxu0 0.0
    %334 = vmatprep.subr.mxu0 0.0
    %335 = vmatpush1.xpose.msra.mxu0 0.0
    %336 = vmatprep.subr.mxu0 0.0
    %337 = vmatpush1.xpose.msra.mxu0 0.0
    %338 = vmatprep.subr.mxu0 0.0
    %339 = vmatpush1.xpose.msra.mxu0 0.0
    %340 = vmatprep.subr.mxu0 0.0
    %341 = vmatpush1.xpose.msra.mxu0 0.0
    %342 = vmatprep.subr.mxu0 0.0
    %343 = vmatpush1.xpose.msra.mxu0 0.0
    %344 = vmatprep.subr.mxu0 0.0
    %345 = vmatpush1.xpose.msra.mxu0 0.0
    %346 = vmatprep.subr.mxu0 0.0
    %347 = vmatpush1.xpose.msra.mxu0 0.0
    %348 = vmatprep.subr.mxu0 0.0
    %349 = vmatpush1.xpose.msra.mxu0 0.0
    %350 = vmatprep.subr.mxu0 0.0
    %351 = vmatpush1.xpose.msra.mxu0 0.0
    %352 = vmatprep.subr.mxu0 0.0
    %353 = vmatpush1.xpose.msra.mxu0 0.0
    %354 = vmatprep.subr.mxu0 0.0
    %355 = vmatpush1.xpose.msra.mxu0 0.0
    %356 = vmatprep.subr.mxu0 0.0
    %357 = vmatpush1.xpose.msra.mxu0 0.0
    %358 = vmatprep.subr.mxu0 0.0
    %359 = vmatpush1.xpose.msra.mxu0 0.0
    %360 = vmatprep.subr.mxu0 0.0
    %361 = vmatpush1.xpose.msra.mxu0 0.0
    %362 = vmatprep.mubr.f32.mxu0 0.0
    %363 = vmatmul.mubr.f32.gmra.mrb[0].mxu0 %v293
    %v364 = vpop.f32.mrb[0].mxu0
    %v365 = vadd.f32 0.0, %v364
    %v366 = vpop.f32.mrb[0].mxu0
    %367 = vdwg.mxu0
    %v369 = vsel %vm206, %v285, 0
    %v372 = vsel %vm206, %v289, 0
    %374 = vmatprep.subr.mxu0 0.0
    %375 = vmatpush1.xpose.msra.mxu0 %v372
    %376 = vmatprep.subr.mxu0 0.0
    %377 = vmatpush1.xpose.msra.mxu0 0.0
    %378 = vmatprep.subr.mxu0 0.0
    %379 = vmatpush1.xpose.msra.mxu0 0.0
    %380 = vmatprep.subr.mxu0 0.0
    %381 = vmatpush1.xpose.msra.mxu0 0.0
    %382 = vmatprep.subr.mxu0 0.0
    %383 = vmatpush1.xpose.msra.mxu0 0.0
    %384 = vmatprep.subr.mxu0 0.0
    %385 = vmatpush1.xpose.msra.mxu0 0.0
    %386 = vmatprep.subr.mxu0 0.0
    %387 = vmatpush1.xpose.msra.mxu0 0.0
    %388 = vmatprep.subr.mxu0 0.0
    %389 = vmatpush1.xpose.msra.mxu0 0.0
    %390 = vmatprep.subr.mxu0 0.0
    %391 = vmatpush1.xpose.msra.mxu0 0.0
    %392 = vmatprep.subr.mxu0 0.0
    %393 = vmatpush1.xpose.msra.mxu0 0.0
    %394 = vmatprep.subr.mxu0 0.0
    %395 = vmatpush1.xpose.msra.mxu0 0.0
    %396 = vmatprep.subr.mxu0 0.0
    %397 = vmatpush1.xpose.msra.mxu0 0.0
    %398 = vmatprep.subr.mxu0 0.0
    %399 = vmatpush1.xpose.msra.mxu0 0.0
    %400 = vmatprep.subr.mxu0 0.0
    %401 = vmatpush1.xpose.msra.mxu0 0.0
    %402 = vmatprep.subr.mxu0 0.0
    %403 = vmatpush1.xpose.msra.mxu0 0.0
    %404 = vmatprep.subr.mxu0 0.0
    %405 = vmatpush1.xpose.msra.mxu0 0.0
    %406 = vmatprep.subr.mxu0 0.0
    %407 = vmatpush1.xpose.msra.mxu0 0.0
    %408 = vmatprep.subr.mxu0 0.0
    %409 = vmatpush1.xpose.msra.mxu0 0.0
    %410 = vmatprep.subr.mxu0 0.0
    %411 = vmatpush1.xpose.msra.mxu0 0.0
    %412 = vmatprep.subr.mxu0 0.0
    %413 = vmatpush1.xpose.msra.mxu0 0.0
    %414 = vmatprep.subr.mxu0 0.0
    %415 = vmatpush1.xpose.msra.mxu0 0.0
    %416 = vmatprep.subr.mxu0 0.0
    %417 = vmatpush1.xpose.msra.mxu0 0.0
    %418 = vmatprep.subr.mxu0 0.0
    %419 = vmatpush1.xpose.msra.mxu0 0.0
    %420 = vmatprep.subr.mxu0 0.0
    %421 = vmatpush1.xpose.msra.mxu0 0.0
    %422 = vmatprep.subr.mxu0 0.0
    %423 = vmatpush1.xpose.msra.mxu0 0.0
    %424 = vmatprep.subr.mxu0 0.0
    %425 = vmatpush1.xpose.msra.mxu0 0.0
    %426 = vmatprep.subr.mxu0 0.0
    %427 = vmatpush1.xpose.msra.mxu0 0.0
    %428 = vmatprep.subr.mxu0 0.0
    %429 = vmatpush1.xpose.msra.mxu0 0.0
    %430 = vmatprep.subr.mxu0 0.0
    %431 = vmatpush1.xpose.msra.mxu0 0.0
    %432 = vmatprep.subr.mxu0 0.0
    %433 = vmatpush1.xpose.msra.mxu0 0.0
    %434 = vmatprep.subr.mxu0 0.0
    %435 = vmatpush1.xpose.msra.mxu0 0.0
    %436 = vmatprep.subr.mxu0 0.0
    %437 = vmatpush1.xpose.msra.mxu0 0.0
    %438 = vmatprep.mubr.f32.mxu0 0.0
    %439 = vmatmul.mubr.f32.gmra.mrb[0].mxu0 %v369
    %v440 = vpop.f32.mrb[0].mxu0
    %v441 = vadd.f32 0.0, %v440
    %v442 = vpop.f32.mrb[0].mxu0
    %443 = vdwg.mxu0
    %vm444 = vcmask 64512
    %v445 = vsel %vm444, %v365, -inf
    %446 = vmax.xlane.f32.xlu0 %v445
    %v447 = vpop.xlane.xlu0 %446
    %v448 = vsel %vm444, %v441, -inf
    %449 = vmax.xlane.f32.xlu0 %v448
    %v450 = vpop.xlane.xlu0 %449
    %v451 = vsub.f32 %v365, %v447
    %v452 = vsub.f32 %v441, %v450
    %v453 = vmul.f32 %v451, 1.442695
    %v454 = vpow.pop %v453
    %v455 = vmul.f32 %v452, 1.442695
    %v456 = vpow.pop %v455
    %v457 = vsel %vm444, %v454, 0.0
    %458 = vadd.xlane.f32.xlu0 %v457
    %v459 = vpop.xlane.xlu0 %458
    %v460 = vsel %vm444, %v456, 0.0
    %461 = vadd.xlane.f32.xlu0 %v460
    %v462 = vpop.xlane.xlu0 %461
    %v463 = vrcp.pop %v459
    %v464 = vmul.f32 %v454, %v463
    %v465 = vrcp.pop %v462
    %v466 = vmul.f32 %v456, %v465
    %v468 = vsel %vm444, %v464, 0
    %470 = vmatprep.subr.mxu0 0.0
    %471 = vmatpush1.msra.mxu0 %v290
    %472 = vmatprep.subr.mxu0 0.0
    %473 = vmatpush1.msra.mxu0 0.0
    %474 = vmatprep.subr.mxu0 0.0
    %475 = vmatpush1.msra.mxu0 0.0
    %476 = vmatprep.subr.mxu0 0.0
    %477 = vmatpush1.msra.mxu0 0.0
    %478 = vmatprep.subr.mxu0 0.0
    %479 = vmatpush1.msra.mxu0 0.0
    %480 = vmatprep.subr.mxu0 0.0
    %481 = vmatpush1.msra.mxu0 0.0
    %482 = vmatprep.subr.mxu0 0.0
    %483 = vmatpush1.msra.mxu0 0.0
    %484 = vmatprep.subr.mxu0 0.0
    %485 = vmatpush1.msra.mxu0 0.0
    %486 = vmatprep.subr.mxu0 0.0
    %487 = vmatpush1.msra.mxu0 0.0
    %488 = vmatprep.subr.mxu0 0.0
    %489 = vmatpush1.msra.mxu0 0.0
    %490 = vmatprep.subr.mxu0 0.0
    %491 = vmatpush1.msra.mxu0 0.0
    %492 = vmatprep.subr.mxu0 0.0
    %493 = vmatpush1.msra.mxu0 0.0
    %494 = vmatprep.subr.mxu0 0.0
    %495 = vmatpush1.msra.mxu0 0.0
    %496 = vmatprep.subr.mxu0 0.0
    %497 = vmatpush1.msra.mxu0 0.0
    %498 = vmatprep.subr.mxu0 0.0
    %499 = vmatpush1.msra.mxu0 0.0
    %500 = vmatprep.subr.mxu0 0.0
    %501 = vmatpush1.msra.mxu0 0.0
    %502 = vmatprep.subr.mxu0 0.0
    %503 = vmatpush1.msra.mxu0 0.0
    %504 = vmatprep.subr.mxu0 0.0
    %505 = vmatpush1.msra.mxu0 0.0
    %506 = vmatprep.subr.mxu0 0.0
    %507 = vmatpush1.msra.mxu0 0.0
    %508 = vmatprep.subr.mxu0 0.0
    %509 = vmatpush1.msra.mxu0 0.0
    %510 = vmatprep.subr.mxu0 0.0
    %511 = vmatpush1.msra.mxu0 0.0
    %512 = vmatprep.subr.mxu0 0.0
    %513 = vmatpush1.msra.mxu0 0.0
    %514 = vmatprep.subr.mxu0 0.0
    %515 = vmatpush1.msra.mxu0 0.0
    %516 = vmatprep.subr.mxu0 0.0
    %517 = vmatpush1.msra.mxu0 0.0
    %518 = vmatprep.subr.mxu0 0.0
    %519 = vmatpush1.msra.mxu0 0.0
    %520 = vmatprep.subr.mxu0 0.0
    %521 = vmatpush1.msra.mxu0 0.0
    %522 = vmatprep.subr.mxu0 0.0
    %523 = vmatpush1.msra.mxu0 0.0
    %524 = vmatprep.subr.mxu0 0.0
    %525 = vmatpush1.msra.mxu0 0.0
    %526 = vmatprep.subr.mxu0 0.0
    %527 = vmatpush1.msra.mxu0 0.0
    %528 = vmatprep.subr.mxu0 0.0
    %529 = vmatpush1.msra.mxu0 0.0
    %530 = vmatprep.subr.mxu0 0.0
    %531 = vmatpush1.msra.mxu0 0.0
    %532 = vmatprep.subr.mxu0 0.0
    %533 = vmatpush1.msra.mxu0 0.0
    %534 = vmatprep.mubr.f32.mxu0 0.0
    %535 = vmatmul.mubr.f32.gmra.mrb[0].mxu0 %v468
    %v536 = vpop.f32.mrb[0].mxu0
    %v537 = vadd.f32 0.0, %v536
    %v538 = vpop.f32.mrb[0].mxu0
    %539 = vdwg.mxu0
    %v541 = vsel %vm444, %v466, 0
    %543 = vmatprep.subr.mxu0 0.0
    %544 = vmatpush1.msra.mxu0 %v291
    %545 = vmatprep.subr.mxu0 0.0
    %546 = vmatpush1.msra.mxu0 0.0
    %547 = vmatprep.subr.mxu0 0.0
    %548 = vmatpush1.msra.mxu0 0.0
    %549 = vmatprep.subr.mxu0 0.0
    %550 = vmatpush1.msra.mxu0 0.0
    %551 = vmatprep.subr.mxu0 0.0
    %552 = vmatpush1.msra.mxu0 0.0
    %553 = vmatprep.subr.mxu0 0.0
    %554 = vmatpush1.msra.mxu0 0.0
    %555 = vmatprep.subr.mxu0 0.0
    %556 = vmatpush1.msra.mxu0 0.0
    %557 = vmatprep.subr.mxu0 0.0
    %558 = vmatpush1.msra.mxu0 0.0
    %559 = vmatprep.subr.mxu0 0.0
    %560 = vmatpush1.msra.mxu0 0.0
    %561 = vmatprep.subr.mxu0 0.0
    %562 = vmatpush1.msra.mxu0 0.0
    %563 = vmatprep.subr.mxu0 0.0
    %564 = vmatpush1.msra.mxu0 0.0
    %565 = vmatprep.subr.mxu0 0.0
    %566 = vmatpush1.msra.mxu0 0.0
    %567 = vmatprep.subr.mxu0 0.0
    %568 = vmatpush1.msra.mxu0 0.0
    %569 = vmatprep.subr.mxu0 0.0
    %570 = vmatpush1.msra.mxu0 0.0
    %571 = vmatprep.subr.mxu0 0.0
    %572 = vmatpush1.msra.mxu0 0.0
    %573 = vmatprep.subr.mxu0 0.0
    %574 = vmatpush1.msra.mxu0 0.0
    %575 = vmatprep.subr.mxu0 0.0
    %576 = vmatpush1.msra.mxu0 0.0
    %577 = vmatprep.subr.mxu0 0.0
    %578 = vmatpush1.msra.mxu0 0.0
    %579 = vmatprep.subr.mxu0 0.0
    %580 = vmatpush1.msra.mxu0 0.0
    %581 = vmatprep.subr.mxu0 0.0
    %582 = vmatpush1.msra.mxu0 0.0
    %583 = vmatprep.subr.mxu0 0.0
    %584 = vmatpush1.msra.mxu0 0.0
    %585 = vmatprep.subr.mxu0 0.0
    %586 = vmatpush1.msra.mxu0 0.0
    %587 = vmatprep.subr.mxu0 0.0
    %588 = vmatpush1.msra.mxu0 0.0
    %589 = vmatprep.subr.mxu0 0.0
    %590 = vmatpush1.msra.mxu0 0.0
    %591 = vmatprep.subr.mxu0 0.0
    %592 = vmatpush1.msra.mxu0 0.0
    %593 = vmatprep.subr.mxu0 0.0
    %594 = vmatpush1.msra.mxu0 0.0
    %595 = vmatprep.subr.mxu0 0.0
    %596 = vmatpush1.msra.mxu0 0.0
    %597 = vmatprep.subr.mxu0 0.0
    %598 = vmatpush1.msra.mxu0 0.0
    %599 = vmatprep.subr.mxu0 0.0
    %600 = vmatpush1.msra.mxu0 0.0
    %601 = vmatprep.subr.mxu0 0.0
    %602 = vmatpush1.msra.mxu0 0.0
    %603 = vmatprep.subr.mxu0 0.0
    %604 = vmatpush1.msra.mxu0 0.0
    %605 = vmatprep.subr.mxu0 0.0
    %606 = vmatpush1.msra.mxu0 0.0
    %607 = vmatprep.mubr.f32.mxu0 0.0
    %608 = vmatmul.mubr.f32.gmra.mrb[0].mxu0 %v541
    %v609 = vpop.f32.mrb[0].mxu0
    %v610 = vadd.f32 0.0, %v609
    %v611 = vpop.f32.mrb[0].mxu0
    %612 = vdwg.mxu0
    %vm613 = vcmask 162816
    %614 = vst.msk [vmem:[#allocation12] sm:$0xff] %vm613, %v537
    %615 = vst.msk [vmem:[#allocation12 + $0x8] sm:$0xff] %vm613, %v610
    %616 = vst.msk [vmem:[#allocation13] sm:$0xff] %vm444, %v464
    %617 = vst.msk [vmem:[#allocation13 + $0x8] sm:$0xff] %vm444, %v466
    // Predicated region
    $region46: #{tpu_custom_call.1} parent=1 // pred_check
      _
    $region47: #{tpu_custom_call.1} parent=1 // pred_check_branch
      %619 = sbr.rel (0) target = $region49
    $region48: #{tpu_custom_call.1} parent=1 // pred_region
      %s621 = ssub.s32 256, 256
      %622 = vsyncadd [#allocation6], %s621
      %s623 = sshll.u32 [#allocation12], 4
      %s624 = int_to_ptr.vmem [resolvable:$true] %s623
      %629 = dma.vmem_to_hbm [thread:$0]  %s624, 256, %s6, [#allocation6], 128, 128, 8
    $region49: #{tpu_custom_call.1} parent=1 // pred_fallthru
      _
    // Predicated region
    $region50: #{tpu_custom_call.1} parent=1 // pred_check
      _
    $region51: #{tpu_custom_call.1} parent=1 // pred_check_branch
      %631 = sbr.rel (0) target = $region53
    $region52: #{tpu_custom_call.1} parent=1 // pred_region
      %s633 = ssub.s32 256, 256
      %634 = vsyncadd [#allocation14], %s633
      %s635 = sshll.u32 [#allocation13], 4
      %s636 = int_to_ptr.vmem [resolvable:$true] %s635
      %641 = dma.vmem_to_hbm [thread:$0]  %s636, 256, %s7, [#allocation14], 128, 128, 8
    $region53: #{tpu_custom_call.1} parent=1 // pred_fallthru
      _
    // Predicated region
    $region54: #{tpu_custom_call.1} parent=1 // pred_check
      _
    $region55: #{tpu_custom_call.1} parent=1 // pred_check_branch
      %643 = sbr.rel (0) target = $region57
    $region56: #{tpu_custom_call.1} parent=1 // pred_region
      %644 = dma.done [#allocation6], 256
    $region57: #{tpu_custom_call.1} parent=1 // pred_fallthru
      _
    // Predicated region
    $region58: #{tpu_custom_call.1} parent=1 // pred_check
      _
    $region59: #{tpu_custom_call.1} parent=1 // pred_check_branch
      %646 = sbr.rel (0) target = $region61
    $region60: #{tpu_custom_call.1} parent=1 // pred_region
      %647 = dma.done [#allocation14], 256
    $region61: #{tpu_custom_call.1} parent=1 // pred_fallthru
      _
    %648 = vsyncpa [#allocation5], 1
    %649 = vsyncpa [#allocation8], 1
    %650 = vsyncpa [#allocation11], 1
    %651 = vsyncpa [#allocation6], 1
    %652 = vsyncpa [#allocation14], 1

</llo_original>
